<compile_context>
chip_gen: v7x
topology: tpu7x:2x2x1
jax: 0.10.0
libtpu: 0.0.40
codegen_flags: <defaults>
</compile_context>

<pallas_src>
import jax
import jax.numpy as jnp
import numpy as np
from jax.experimental import pallas as pl
from jax.experimental.pallas import tpu as pltpu

_LANE = 128


def _round_up(n, m):
    return pl.cdiv(n, m) * m


# ---------------------------------------------------------------------------
# Fused kernel: im2col-conv + bias + ReLU + avg-pool + classifier head
# ---------------------------------------------------------------------------
def _slda_fused_kernel(p_ref, wc_ref, bc_ref, pool_ref, ws_ref, bcls_ref,
                       o_ref):
    # p_ref:    (mt, K)     im2col patches (K unpadded = KH*KW*CIN)
    # wc_ref:   (K, Fp)     conv weights   (F lane-padded)
    # bc_ref:   (1, Fp)     conv bias
    # pool_ref: (bt, mt)    precomputed mean-pool matrix (1/ho_wo on valid rows)
    # ws_ref:   (Fp, Cp)    classifier W, pre-transposed to (F, C) layout
    # bcls_ref: (1, Cp)     classifier b
    # o_ref:    (bt, Cp)    padded logits

    # Conv as a single im2col matmul on the MXU, then bias + ReLU on the VPU.
    acc = jnp.dot(p_ref[...], wc_ref[...],
                  preferred_element_type=jnp.float32)            # (mt, Fp)
    acc = jnp.maximum(acc + bc_ref[...], 0.0)

    # Global average pool as a block-pooling matmul (keeps the 196-deep
    # reduction on the MXU instead of the XLU); pool matrix is a constant
    # input so no per-step iota/compare filler work.
    feats = jnp.dot(pool_ref[...], acc,
                    preferred_element_type=jnp.float32)          # (bt, Fp)

    # Classifier head in natural (M, K) x (K, N) layout.
    o_ref[...] = jnp.dot(feats, ws_ref[...],
                         preferred_element_type=jnp.float32) + bcls_ref[...]


# ---------------------------------------------------------------------------
# Wrapper: im2col + padding + single pallas_call
# ---------------------------------------------------------------------------
def slda_forward(x_nchw, conv_w, conv_b, W, b, *, batch_tile=None):
    B, CIN, H, Wd = x_nchw.shape
    KH, KW, _, F = conv_w.shape
    C = W.shape[0]
    HO, WO = H - KH + 1, Wd - KW + 1
    ho_wo = HO * WO
    K = KH * KW * CIN

    bt = B if batch_tile is None else batch_tile
    assert B % bt == 0
    # Output block is (bt, Cp): its sublane dim must be a multiple of 8 or the
    # full batch.  (For v7x 2-TC sharding pick bt = B // 2 once B >= 16.)
    assert bt == B or bt % 8 == 0

    # Pad per-image spatial rows so mt = bt * ho_wo_p is sublane-aligned when
    # bt < B.  Padded (zero) patch rows produce relu(conv_bias) > 0 but are
    # excluded by the pool mask (built from the *padded* stride below).
    ho_wo_p = ho_wo if (bt * ho_wo) % 8 == 0 else _round_up(ho_wo, 8)
    mt = bt * ho_wo_p

    Fp = _round_up(F, _LANE)
    Cp = _round_up(C, _LANE)

    # im2col in the wrapper: absorbs the NCHW layout (no separate transpose
    # pass) and keeps the kernel to one fused-K matmul.  K stays at 36 — the
    # contraction dim is a full-extent last axis, so no lane padding needed.
    # TODO(synk): for large H*W / B, build the 9 tap contributions in-kernel
    # from raw x instead of materializing the 9x-inflated patch matrix in HBM.
    taps = []
    for kh in range(KH):
        for kw in range(KW):
            taps.append(x_nchw[:, :, kh:kh + HO, kw:kw + WO])  # (B,CIN,HO,WO)
    patches = jnp.stack(taps, axis=0)                    # (KH*KW,B,CIN,HO,WO)
    patches = jnp.transpose(patches, (1, 3, 4, 0, 2))    # (B,HO,WO,KH*KW,CIN)
    patches = patches.reshape(B, ho_wo, K)
    patches = jnp.pad(patches, ((0, 0), (0, ho_wo_p - ho_wo), (0, 0)))
    patches = patches.reshape(B * ho_wo_p, K)

    # Conv weights in natural (K, F) layout; only the F output lane dim padded.
    wc_p = jnp.pad(conv_w.reshape(K, F), ((0, 0), (0, Fp - F)))
    bc_p = jnp.pad(conv_b.reshape(1, F), ((0, 0), (0, Fp - F)))

    # Classifier weights pre-transposed to (Fp, Cp): the in-kernel head matmul
    # then contracts the RHS major dim (no Mosaic relayout); bias -> (1, Cp).
    ws_p = jnp.pad(W.T, ((0, Fp - F), (0, Cp - C)))
    bcls_p = jnp.pad(b.reshape(1, C), ((0, 0), (0, Cp - C)))

    # Host-constant block-pool matrix (bt, mt): row r averages the ho_wo valid
    # spatial rows of image r within the tile (1/ho_wo), padded rows weight 0.
    pool_np = np.zeros((bt, mt), np.float32)
    for r in range(bt):
        pool_np[r, r * ho_wo_p:r * ho_wo_p + ho_wo] = np.float32(1.0 / ho_wo)
    pool = jnp.asarray(pool_np)

    logits_p = pl.pallas_call(
        _slda_fused_kernel,
        out_shape=jax.ShapeDtypeStruct((B, Cp), jnp.float32),
        grid=(B // bt,),
        in_specs=[
            pl.BlockSpec((mt, K), lambda i: (i, 0)),     # patches (per tile)
            pl.BlockSpec((K, Fp), lambda i: (0, 0)),     # conv W  (resident)
            pl.BlockSpec((1, Fp), lambda i: (0, 0)),     # conv b
            pl.BlockSpec((bt, mt), lambda i: (0, 0)),    # pool matrix
            pl.BlockSpec((Fp, Cp), lambda i: (0, 0)),    # classifier W.T
            pl.BlockSpec((1, Cp), lambda i: (0, 0)),     # classifier b
        ],
        out_specs=pl.BlockSpec((bt, Cp), lambda i: (i, 0)),
        compiler_params=pltpu.CompilerParams(
            dimension_semantics=("parallel",)),
    )(patches, wc_p, bc_p, pool, ws_p, bcls_p)

    return logits_p[:, :C]


# ---------------------------------------------------------------------------
# Pure-JAX reference for correctness checking.
# ---------------------------------------------------------------------------
def slda_forward_ref(x_nchw, conv_w, conv_b, W, b):
    w_oihw = jnp.transpose(conv_w, (3, 2, 0, 1))
    y = jax.lax.conv_general_dilated(
        x_nchw, w_oihw, (1, 1), "VALID",
        dimension_numbers=("NCHW", "OIHW", "NCHW"))
    y = y + conv_b[None, :, None, None]
    y = jnp.maximum(y, 0.0)
    feats = jnp.mean(y, axis=(2, 3))                   # (B, F)
    return feats @ W.T + b[None, :]


if __name__ == "__main__":
    B, CIN, H, Wd = 2, 4, 16, 16      # batch=2, channels=4, 16x16 input
    F = 32                            # fc_input (feature dim of base model)
    C = 8                             # output_classes
    KH = KW = 3

    key = jax.random.PRNGKey(0)
    k0, k1, k2, k3, k4 = jax.random.split(key, 5)

    x = jax.random.normal(k0, (B, CIN, H, Wd), jnp.float32)

    # Feature-extractor parameters (deterministic synthetic init).
    conv_w = 0.1 * jax.random.normal(k1, (KH, KW, CIN, F), jnp.float32)
    conv_b = 0.1 * jax.random.normal(k2, (F,), jnp.float32)

    # SLDA classifier parameters.  In the PyTorch module these start as zeros
    # (updated online via update_final_layer); use random values so the kernel
    # output is non-trivial.
    W = 0.1 * jax.random.normal(k3, (C, F), jnp.float32)
    b = 0.1 * jax.random.normal(k4, (C,), jnp.float32)
    # TODO(synk): update_final_layer (online per-class mean / precision-matrix
    # updates) is stateful training-time logic, not part of forward; not
    # implemented as a kernel.

    out = slda_forward(x, conv_w, conv_b, W, b)
    out = jax.block_until_ready(out)

    ref = slda_forward_ref(x, conv_w, conv_b, W, b)
    np.testing.assert_allclose(np.asarray(out), np.asarray(ref),
                               rtol=1e-4, atol=1e-4)
    assert out.shape == (B, C) and out.dtype == jnp.float32

    print("KERNEL_OK")
</pallas_src>

<mosaic_0001>
module attributes {stable_mosaic.version = 11 : i64} {
  func.func @_slda_fused_kernel(%arg0: i32, %arg1: memref<392x36xf32, #tpu.memory_space<vmem>>, %arg2: memref<36x128xf32, #tpu.memory_space<vmem>>, %arg3: memref<1x128xf32, #tpu.memory_space<vmem>>, %arg4: memref<2x392xf32, #tpu.memory_space<vmem>>, %arg5: memref<128x128xf32, #tpu.memory_space<vmem>>, %arg6: memref<1x128xf32, #tpu.memory_space<vmem>>, %arg7: memref<2x128xf32, #tpu.memory_space<vmem>>) attributes {dimension_semantics = [#tpu.dimension_semantics<parallel>], iteration_bounds = array<i64: 1>, scalar_prefetch = 0 : i64, scratch_operands = 0 : i64, tpu.core_type = #tpu.core_type<tc>, window_params = [{transform_indices = @transform_0, window_bounds = array<i64: 392, 36>}, {pipeline_mode = #tpu.pipeline_mode<synchronous>, transform_indices = @transform_1, window_bounds = array<i64: 36, 128>}, {pipeline_mode = #tpu.pipeline_mode<synchronous>, transform_indices = @transform_2, window_bounds = array<i64: 1, 128>}, {pipeline_mode = #tpu.pipeline_mode<synchronous>, transform_indices = @transform_3, window_bounds = array<i64: 2, 392>}, {pipeline_mode = #tpu.pipeline_mode<synchronous>, transform_indices = @transform_4, window_bounds = array<i64: 128, 128>}, {pipeline_mode = #tpu.pipeline_mode<synchronous>, transform_indices = @transform_5, window_bounds = array<i64: 1, 128>}, {transform_indices = @transform_6, window_bounds = array<i64: 2, 128>}]} {
    %c0 = arith.constant 0 : index
    %c0_0 = arith.constant 0 : index
    %0 = vector.load %arg1[%c0, %c0_0] : memref<392x36xf32, #tpu.memory_space<vmem>>, vector<392x36xf32>
    %c0_1 = arith.constant 0 : index
    %c0_2 = arith.constant 0 : index
    %1 = vector.load %arg2[%c0_1, %c0_2] : memref<36x128xf32, #tpu.memory_space<vmem>>, vector<36x128xf32>
    %cst = arith.constant dense<0.000000e+00> : vector<392x128xf32>
    %2 = tpu.matmul %0, %1, %cst {dimension_numbers = #tpu.dot_dimension_numbers<[1], [0], [0], [1], [0, 0, 1, 1], [], []>} : vector<392x36xf32>, vector<36x128xf32>, vector<392x128xf32> -> vector<392x128xf32>
    %c0_3 = arith.constant 0 : index
    %c0_4 = arith.constant 0 : index
    %3 = vector.load %arg3[%c0_3, %c0_4] : memref<1x128xf32, #tpu.memory_space<vmem>>, vector<1x128xf32>
    %4 = vector.broadcast %3 : vector<1x128xf32> to vector<392x128xf32>
    %5 = arith.addf %2, %4 : vector<392x128xf32>
    %cst_5 = arith.constant 0.000000e+00 : f32
    %6 = vector.broadcast %cst_5 : f32 to vector<392x128xf32>
    %7 = arith.maximumf %5, %6 : vector<392x128xf32>
    %c0_6 = arith.constant 0 : index
    %c0_7 = arith.constant 0 : index
    %8 = vector.load %arg4[%c0_6, %c0_7] : memref<2x392xf32, #tpu.memory_space<vmem>>, vector<2x392xf32>
    %cst_8 = arith.constant dense<0.000000e+00> : vector<2x128xf32>
    %9 = tpu.matmul %8, %7, %cst_8 {dimension_numbers = #tpu.dot_dimension_numbers<[1], [0], [0], [1], [0, 0, 1, 1], [], []>} : vector<2x392xf32>, vector<392x128xf32>, vector<2x128xf32> -> vector<2x128xf32>
    %c0_9 = arith.constant 0 : index
    %c0_10 = arith.constant 0 : index
    %10 = vector.load %arg5[%c0_9, %c0_10] : memref<128x128xf32, #tpu.memory_space<vmem>>, vector<128x128xf32>
    %cst_11 = arith.constant dense<0.000000e+00> : vector<2x128xf32>
    %11 = tpu.matmul %9, %10, %cst_11 {dimension_numbers = #tpu.dot_dimension_numbers<[1], [0], [0], [1], [0, 0, 1, 1], [], []>} : vector<2x128xf32>, vector<128x128xf32>, vector<2x128xf32> -> vector<2x128xf32>
    %c0_12 = arith.constant 0 : index
    %c0_13 = arith.constant 0 : index
    %12 = vector.load %arg6[%c0_12, %c0_13] : memref<1x128xf32, #tpu.memory_space<vmem>>, vector<1x128xf32>
    %13 = vector.broadcast %12 : vector<1x128xf32> to vector<2x128xf32>
    %14 = arith.addf %11, %13 : vector<2x128xf32>
    %c0_14 = arith.constant 0 : index
    %c0_15 = arith.constant 0 : index
    %15 = vector.load %arg7[%c0_14, %c0_15] : memref<2x128xf32, #tpu.memory_space<vmem>>, vector<2x128xf32>
    tpu.vector_store %arg7[%c0_14, %c0_15], %14 {strides = array<i32>} : memref<2x128xf32, #tpu.memory_space<vmem>>, vector<2x128xf32>,
    return
  }
  func.func @transform_0(%arg0: i32) -> (i32, i32) {
    %c0_i32 = arith.constant 0 : i32
    %c0_i32_0 = arith.constant 0 : i32
    return %arg0, %c0_i32 : i32, i32
  }
  func.func @transform_1(%arg0: i32) -> (i32, i32) {
    %c0_i32 = arith.constant 0 : i32
    %c0_i32_0 = arith.constant 0 : i32
    %c0_i32_1 = arith.constant 0 : i32
    return %c0_i32, %c0_i32_0 : i32, i32
  }
  func.func @transform_2(%arg0: i32) -> (i32, i32) {
    %c0_i32 = arith.constant 0 : i32
    %c0_i32_0 = arith.constant 0 : i32
    %c0_i32_1 = arith.constant 0 : i32
    return %c0_i32, %c0_i32_0 : i32, i32
  }
  func.func @transform_3(%arg0: i32) -> (i32, i32) {
    %c0_i32 = arith.constant 0 : i32
    %c0_i32_0 = arith.constant 0 : i32
    %c0_i32_1 = arith.constant 0 : i32
    return %c0_i32, %c0_i32_0 : i32, i32
  }
  func.func @transform_4(%arg0: i32) -> (i32, i32) {
    %c0_i32 = arith.constant 0 : i32
    %c0_i32_0 = arith.constant 0 : i32
    %c0_i32_1 = arith.constant 0 : i32
    return %c0_i32, %c0_i32_0 : i32, i32
  }
  func.func @transform_5(%arg0: i32) -> (i32, i32) {
    %c0_i32 = arith.constant 0 : i32
    %c0_i32_0 = arith.constant 0 : i32
    %c0_i32_1 = arith.constant 0 : i32
    return %c0_i32, %c0_i32_0 : i32, i32
  }
  func.func @transform_6(%arg0: i32) -> (i32, i32) {
    %c0_i32 = arith.constant 0 : i32
    %c0_i32_0 = arith.constant 0 : i32
    return %arg0, %c0_i32 : i32, i32
  }
}

</mosaic_0001>

<llo_original>
// kernel: tpu_custom_call.1
$region0: #{tpu_custom_call.1}
  #allocation0 [shape = 'u32[]', space=smem, size = 0x4, offset = 0x4, fixed_abs, tag = 'smem constant byte address 0x4 - core index']
  #allocation1 [shape = 'u32[144,128]{1,0:T(1,128)}', space=vmem, size = 0x12000, scoped, tag = 'internal scratch']
  %s0 = inlined_call_operand.vmem [shape: f32[392,36], index: 0, kind: input, shape index: {}]
  %s1 = inlined_call_operand.vmem [shape: f32[36,128], index: 1, kind: input, shape index: {}]
  %s2 = inlined_call_operand.vmem [shape: f32[1,128], index: 2, kind: input, shape index: {}]
  %s3 = inlined_call_operand.vmem [shape: f32[2,392], index: 3, kind: input, shape index: {}]
  %s4 = inlined_call_operand.vmem [shape: f32[128,128], index: 4, kind: input, shape index: {}]
  %s5 = inlined_call_operand.vmem [shape: f32[1,128], index: 5, kind: input, shape index: {}]
  %s6 = inlined_call_operand.hbm [shape: f32[2,128], index: 6, kind: output, shape index: {}]
  %s7 = sld [smem:[#allocation0]]
  $region34: #{tpu_custom_call.1} parent=0
    _
  %s9 = ssub.s32 1, %s7
  %s10 = scalar_select 0, %s9, %s7
  $region1: #{tpu_custom_call.1} parent=0
    #allocation2 [shape = 'u8[1024]{0}', space=vmem, size = 0x400, scoped, tag = 'output window, operand 0, single buffered']
    #allocation3 [shape = 's32[1]{0}', space=sflag, size = 0x4, scoped, tag = 'scoped memory for tpu_custom_call.1']
    %11 = vsyncpa [#allocation3], 0
    // Predicated region
    $region2: #{tpu_custom_call.1} parent=1 // pred_check
      _
    $region3: #{tpu_custom_call.1} parent=1 // pred_check_branch
      %13 = sbr.rel (0) target = $region5
    $region4: #{tpu_custom_call.1} parent=1 // pred_region
      _
    $region5: #{tpu_custom_call.1} parent=1 // pred_fallthru
      _
    // Predicated region
    $region6: #{tpu_custom_call.1} parent=1 // pred_check
      _
    $region7: #{tpu_custom_call.1} parent=1 // pred_check_branch
      %15 = sbr.rel (0) target = $region9
    $region8: #{tpu_custom_call.1} parent=1 // pred_region
      _
    $region9: #{tpu_custom_call.1} parent=1 // pred_fallthru
      _
    // Predicated region
    $region10: #{tpu_custom_call.1} parent=1 // pred_check
      _
    $region11: #{tpu_custom_call.1} parent=1 // pred_check_branch
      %17 = sbr.rel (0) target = $region13
    $region12: #{tpu_custom_call.1} parent=1 // pred_region
      _
    $region13: #{tpu_custom_call.1} parent=1 // pred_fallthru
      _
    // Predicated region
    $region14: #{tpu_custom_call.1} parent=1 // pred_check
      _
    $region15: #{tpu_custom_call.1} parent=1 // pred_check_branch
      %19 = sbr.rel (0) target = $region17
    $region16: #{tpu_custom_call.1} parent=1 // pred_region
      _
    $region17: #{tpu_custom_call.1} parent=1 // pred_fallthru
      _
    // Predicated region
    $region18: #{tpu_custom_call.1} parent=1 // pred_check
      _
    $region19: #{tpu_custom_call.1} parent=1 // pred_check_branch
      %21 = sbr.rel (0) target = $region21
    $region20: #{tpu_custom_call.1} parent=1 // pred_region
      _
    $region21: #{tpu_custom_call.1} parent=1 // pred_fallthru
      _
    // Predicated region
    $region22: #{tpu_custom_call.1} parent=1 // pred_check
      _
    $region23: #{tpu_custom_call.1} parent=1 // pred_check_branch
      %23 = sbr.rel (0) target = $region25
    $region24: #{tpu_custom_call.1} parent=1 // pred_region
      _
    $region25: #{tpu_custom_call.1} parent=1 // pred_fallthru
      _
    %v24 = vld [vmem:[%s0] sm:$0xff]
    %v25 = vld [vmem:[%s0 + $0x8] sm:$0xff]
    %v26 = vld [vmem:[%s0 + $0x10] sm:$0xff]
    %v27 = vld [vmem:[%s0 + $0x18] sm:$0xff]
    %v28 = vld [vmem:[%s0 + $0x20] sm:$0xff]
    %v29 = vld [vmem:[%s0 + $0x28] sm:$0xff]
    %v30 = vld [vmem:[%s0 + $0x30] sm:$0xff]
    %v31 = vld [vmem:[%s0 + $0x38] sm:$0xff]
    %v32 = vld [vmem:[%s0 + $0x40] sm:$0xff]
    %v33 = vld [vmem:[%s0 + $0x48] sm:$0xff]
    %v34 = vld [vmem:[%s0 + $0x50] sm:$0xff]
    %v35 = vld [vmem:[%s0 + $0x58] sm:$0xff]
    %v36 = vld [vmem:[%s0 + $0x60] sm:$0xff]
    %v37 = vld [vmem:[%s0 + $0x68] sm:$0xff]
    %v38 = vld [vmem:[%s0 + $0x70] sm:$0xff]
    %v39 = vld [vmem:[%s0 + $0x78] sm:$0xff]
    %v40 = vld [vmem:[%s0 + $0x80] sm:$0xff]
    %v41 = vld [vmem:[%s0 + $0x88] sm:$0xff]
    %v42 = vld [vmem:[%s0 + $0x90] sm:$0xff]
    %v43 = vld [vmem:[%s0 + $0x98] sm:$0xff]
    %v44 = vld [vmem:[%s0 + $0xa0] sm:$0xff]
    %v45 = vld [vmem:[%s0 + $0xa8] sm:$0xff]
    %v46 = vld [vmem:[%s0 + $0xb0] sm:$0xff]
    %v47 = vld [vmem:[%s0 + $0xb8] sm:$0xff]
    %v48 = vld [vmem:[%s0 + $0xc0] sm:$0xff]
    %v49 = vld [vmem:[%s0 + $0xc8] sm:$0xff]
    %v50 = vld [vmem:[%s0 + $0xd0] sm:$0xff]
    %v51 = vld [vmem:[%s0 + $0xd8] sm:$0xff]
    %v52 = vld [vmem:[%s0 + $0xe0] sm:$0xff]
    %v53 = vld [vmem:[%s0 + $0xe8] sm:$0xff]
    %v54 = vld [vmem:[%s0 + $0xf0] sm:$0xff]
    %v55 = vld [vmem:[%s0 + $0xf8] sm:$0xff]
    %v56 = vld [vmem:[%s0 + $0x100] sm:$0xff]
    %v57 = vld [vmem:[%s0 + $0x108] sm:$0xff]
    %v58 = vld [vmem:[%s0 + $0x110] sm:$0xff]
    %v59 = vld [vmem:[%s0 + $0x118] sm:$0xff]
    %v60 = vld [vmem:[%s0 + $0x120] sm:$0xff]
    %v61 = vld [vmem:[%s0 + $0x128] sm:$0xff]
    %v62 = vld [vmem:[%s0 + $0x130] sm:$0xff]
    %v63 = vld [vmem:[%s0 + $0x138] sm:$0xff]
    %v64 = vld [vmem:[%s0 + $0x140] sm:$0xff]
    %v65 = vld [vmem:[%s0 + $0x148] sm:$0xff]
    %v66 = vld [vmem:[%s0 + $0x150] sm:$0xff]
    %v67 = vld [vmem:[%s0 + $0x158] sm:$0xff]
    %v68 = vld [vmem:[%s0 + $0x160] sm:$0xff]
    %v69 = vld [vmem:[%s0 + $0x168] sm:$0xff]
    %v70 = vld [vmem:[%s0 + $0x170] sm:$0xff]
    %v71 = vld [vmem:[%s0 + $0x178] sm:$0xff]
    %v72 = vld [vmem:[%s0 + $0x180] sm:$0xff]
    %v73 = vld [vmem:[%s1] sm:$0xff]
    %v74 = vld [vmem:[%s1 + $0x8] sm:$0xff]
    %v75 = vld [vmem:[%s1 + $0x10] sm:$0xff]
    %v76 = vld [vmem:[%s1 + $0x18] sm:$0xff]
    %v77 = vld [vmem:[%s1 + $0x20] sm:$0xf]
    %v78 = vld [vmem:[%s2] sm:$0x1]
    %v80 = vlaneseq
    %v81 = vshrl.u32 %v80, 7
    %v82 = vsub.s32 0, %v81
    %v83 = vrot.slane %v78, %v82
    %vm85 = vcmask 293888
    %v87 = vsel %vm85, %v24, 0
    %v90 = vsel %vm85, %v25, 0
    %v93 = vsel %vm85, %v26, 0
    %v96 = vsel %vm85, %v27, 0
    %v99 = vsel %vm85, %v28, 0
    %v102 = vsel %vm85, %v29, 0
    %v105 = vsel %vm85, %v30, 0
    %v108 = vsel %vm85, %v31, 0
    %v111 = vsel %vm85, %v32, 0
    %v114 = vsel %vm85, %v33, 0
    %v117 = vsel %vm85, %v34, 0
    %v120 = vsel %vm85, %v35, 0
    %v123 = vsel %vm85, %v36, 0
    %v126 = vsel %vm85, %v37, 0
    %v129 = vsel %vm85, %v38, 0
    %v132 = vsel %vm85, %v39, 0
    %v135 = vsel %vm85, %v40, 0
    %v138 = vsel %vm85, %v41, 0
    %v141 = vsel %vm85, %v42, 0
    %v144 = vsel %vm85, %v43, 0
    %v147 = vsel %vm85, %v44, 0
    %v150 = vsel %vm85, %v45, 0
    %v153 = vsel %vm85, %v46, 0
    %v156 = vsel %vm85, %v47, 0
    %v159 = vsel %vm85, %v48, 0
    %v162 = vsel %vm85, %v49, 0
    %v165 = vsel %vm85, %v50, 0
    %v168 = vsel %vm85, %v51, 0
    %v171 = vsel %vm85, %v52, 0
    %v174 = vsel %vm85, %v53, 0
    %v177 = vsel %vm85, %v54, 0
    %v180 = vsel %vm85, %v55, 0
    %v183 = vsel %vm85, %v56, 0
    %v186 = vsel %vm85, %v57, 0
    %v189 = vsel %vm85, %v58, 0
    %v192 = vsel %vm85, %v59, 0
    %v195 = vsel %vm85, %v60, 0
    %v198 = vsel %vm85, %v61, 0
    %v201 = vsel %vm85, %v62, 0
    %v204 = vsel %vm85, %v63, 0
    %v207 = vsel %vm85, %v64, 0
    %v210 = vsel %vm85, %v65, 0
    %v213 = vsel %vm85, %v66, 0
    %v216 = vsel %vm85, %v67, 0
    %v219 = vsel %vm85, %v68, 0
    %v222 = vsel %vm85, %v69, 0
    %v225 = vsel %vm85, %v70, 0
    %v228 = vsel %vm85, %v71, 0
    %v231 = vsel %vm85, %v72, 0
    %vm233 = vcmask 1043456
    %v235 = vsel %vm233, %v77, 0
    %237 = vmatprep.subr.mxu0 0.0
    %238 = vmatpush1.msra.mxu0 %v73
    %239 = vmatprep.subr.mxu0 0.0
    %240 = vmatpush1.msra.mxu0 %v74
    %241 = vmatprep.subr.mxu0 0.0
    %242 = vmatpush1.msra.mxu0 %v75
    %243 = vmatprep.subr.mxu0 0.0
    %244 = vmatpush1.msra.mxu0 %v76
    %245 = vmatprep.subr.mxu0 0.0
    %246 = vmatpush1.msra.mxu0 %v235
    %247 = vmatprep.subr.mxu0 0.0
    %248 = vmatpush1.msra.mxu0 0.0
    %249 = vmatprep.subr.mxu0 0.0
    %250 = vmatpush1.msra.mxu0 0.0
    %251 = vmatprep.subr.mxu0 0.0
    %252 = vmatpush1.msra.mxu0 0.0
    %253 = vmatprep.subr.mxu0 0.0
    %254 = vmatpush1.msra.mxu0 0.0
    %255 = vmatprep.subr.mxu0 0.0
    %256 = vmatpush1.msra.mxu0 0.0
    %257 = vmatprep.subr.mxu0 0.0
    %258 = vmatpush1.msra.mxu0 0.0
    %259 = vmatprep.subr.mxu0 0.0
    %260 = vmatpush1.msra.mxu0 0.0
    %261 = vmatprep.subr.mxu0 0.0
    %262 = vmatpush1.msra.mxu0 0.0
    %263 = vmatprep.subr.mxu0 0.0
    %264 = vmatpush1.msra.mxu0 0.0
    %265 = vmatprep.subr.mxu0 0.0
    %266 = vmatpush1.msra.mxu0 0.0
    %267 = vmatprep.subr.mxu0 0.0
    %268 = vmatpush1.msra.mxu0 0.0
    %269 = vmatprep.subr.mxu0 0.0
    %270 = vmatpush1.msra.mxu0 0.0
    %271 = vmatprep.subr.mxu0 0.0
    %272 = vmatpush1.msra.mxu0 0.0
    %273 = vmatprep.subr.mxu0 0.0
    %274 = vmatpush1.msra.mxu0 0.0
    %275 = vmatprep.subr.mxu0 0.0
    %276 = vmatpush1.msra.mxu0 0.0
    %277 = vmatprep.subr.mxu0 0.0
    %278 = vmatpush1.msra.mxu0 0.0
    %279 = vmatprep.subr.mxu0 0.0
    %280 = vmatpush1.msra.mxu0 0.0
    %281 = vmatprep.subr.mxu0 0.0
    %282 = vmatpush1.msra.mxu0 0.0
    %283 = vmatprep.subr.mxu0 0.0
    %284 = vmatpush1.msra.mxu0 0.0
    %285 = vmatprep.subr.mxu0 0.0
    %286 = vmatpush1.msra.mxu0 0.0
    %287 = vmatprep.subr.mxu0 0.0
    %288 = vmatpush1.msra.mxu0 0.0
    %289 = vmatprep.subr.mxu0 0.0
    %290 = vmatpush1.msra.mxu0 0.0
    %291 = vmatprep.subr.mxu0 0.0
    %292 = vmatpush1.msra.mxu0 0.0
    %293 = vmatprep.subr.mxu0 0.0
    %294 = vmatpush1.msra.mxu0 0.0
    %295 = vmatprep.subr.mxu0 0.0
    %296 = vmatpush1.msra.mxu0 0.0
    %297 = vmatprep.subr.mxu0 0.0
    %298 = vmatpush1.msra.mxu0 0.0
    %299 = vmatprep.subr.mxu0 0.0
    %300 = vmatpush1.msra.mxu0 0.0
    %301 = vmatprep.mubr.f32.mxu0 0.0
    %302 = vmatmul.mubr.f32.gmra.mrb[0].mxu0 %v87
    %v303 = vpop.f32.mrb[0].mxu0
    %v304 = vadd.f32 %v83, %v303
    %v305 = vpop.f32.mrb[0].mxu0
    %306 = vmatprep.mubr.f32.mxu0 0.0
    %307 = vmatmul.mubr.f32.gmra.mrb[0].mxu0 %v90
    %v308 = vpop.f32.mrb[0].mxu0
    %v309 = vadd.f32 %v83, %v308
    %v310 = vpop.f32.mrb[0].mxu0
    %311 = vmatprep.mubr.f32.mxu0 0.0
    %312 = vmatmul.mubr.f32.gmra.mrb[0].mxu0 %v93
    %v313 = vpop.f32.mrb[0].mxu0
    %v314 = vadd.f32 %v83, %v313
    %v315 = vpop.f32.mrb[0].mxu0
    %316 = vmatprep.mubr.f32.mxu0 0.0
    %317 = vmatmul.mubr.f32.gmra.mrb[0].mxu0 %v96
    %v318 = vpop.f32.mrb[0].mxu0
    %v319 = vadd.f32 %v83, %v318
    %v320 = vpop.f32.mrb[0].mxu0
    %321 = vmatprep.mubr.f32.mxu0 0.0
    %322 = vmatmul.mubr.f32.gmra.mrb[0].mxu0 %v99
    %v323 = vpop.f32.mrb[0].mxu0
    %v324 = vadd.f32 %v83, %v323
    %v325 = vpop.f32.mrb[0].mxu0
    %326 = vmatprep.mubr.f32.mxu0 0.0
    %327 = vmatmul.mubr.f32.gmra.mrb[0].mxu0 %v102
    %v328 = vpop.f32.mrb[0].mxu0
    %v329 = vadd.f32 %v83, %v328
    %v330 = vpop.f32.mrb[0].mxu0
    %331 = vmatprep.mubr.f32.mxu0 0.0
    %332 = vmatmul.mubr.f32.gmra.mrb[0].mxu0 %v105
    %v333 = vpop.f32.mrb[0].mxu0
    %v334 = vadd.f32 %v83, %v333
    %v335 = vpop.f32.mrb[0].mxu0
    %336 = vmatprep.mubr.f32.mxu0 0.0
    %337 = vmatmul.mubr.f32.gmra.mrb[0].mxu0 %v108
    %v338 = vpop.f32.mrb[0].mxu0
    %v339 = vadd.f32 %v83, %v338
    %v340 = vpop.f32.mrb[0].mxu0
    %341 = vmatprep.mubr.f32.mxu0 0.0
    %342 = vmatmul.mubr.f32.gmra.mrb[0].mxu0 %v111
    %v343 = vpop.f32.mrb[0].mxu0
    %v344 = vadd.f32 %v83, %v343
    %v345 = vpop.f32.mrb[0].mxu0
    %346 = vmatprep.mubr.f32.mxu0 0.0
    %347 = vmatmul.mubr.f32.gmra.mrb[0].mxu0 %v114
    %v348 = vpop.f32.mrb[0].mxu0
    %v349 = vadd.f32 %v83, %v348
    %v350 = vpop.f32.mrb[0].mxu0
    %351 = vmatprep.mubr.f32.mxu0 0.0
    %352 = vmatmul.mubr.f32.gmra.mrb[0].mxu0 %v117
    %v353 = vpop.f32.mrb[0].mxu0
    %v354 = vadd.f32 %v83, %v353
    %v355 = vpop.f32.mrb[0].mxu0
    %356 = vmatprep.mubr.f32.mxu0 0.0
    %357 = vmatmul.mubr.f32.gmra.mrb[0].mxu0 %v120
    %v358 = vpop.f32.mrb[0].mxu0
    %v359 = vadd.f32 %v83, %v358
    %v360 = vpop.f32.mrb[0].mxu0
    %361 = vmatprep.mubr.f32.mxu0 0.0
    %362 = vmatmul.mubr.f32.gmra.mrb[0].mxu0 %v123
    %v363 = vpop.f32.mrb[0].mxu0
    %v364 = vadd.f32 %v83, %v363
    %v365 = vpop.f32.mrb[0].mxu0
    %366 = vmatprep.mubr.f32.mxu0 0.0
    %367 = vmatmul.mubr.f32.gmra.mrb[0].mxu0 %v126
    %v368 = vpop.f32.mrb[0].mxu0
    %v369 = vadd.f32 %v83, %v368
    %v370 = vpop.f32.mrb[0].mxu0
    %371 = vmatprep.mubr.f32.mxu0 0.0
    %372 = vmatmul.mubr.f32.gmra.mrb[0].mxu0 %v129
    %v373 = vpop.f32.mrb[0].mxu0
    %v374 = vadd.f32 %v83, %v373
    %v375 = vpop.f32.mrb[0].mxu0
    %376 = vmatprep.mubr.f32.mxu0 0.0
    %377 = vmatmul.mubr.f32.gmra.mrb[0].mxu0 %v132
    %v378 = vpop.f32.mrb[0].mxu0
    %v379 = vadd.f32 %v83, %v378
    %v380 = vpop.f32.mrb[0].mxu0
    %381 = vmatprep.mubr.f32.mxu0 0.0
    %382 = vmatmul.mubr.f32.gmra.mrb[0].mxu0 %v135
    %v383 = vpop.f32.mrb[0].mxu0
    %v384 = vadd.f32 %v83, %v383
    %v385 = vpop.f32.mrb[0].mxu0
    %386 = vmatprep.mubr.f32.mxu0 0.0
    %387 = vmatmul.mubr.f32.gmra.mrb[0].mxu0 %v138
    %v388 = vpop.f32.mrb[0].mxu0
    %v389 = vadd.f32 %v83, %v388
    %v390 = vpop.f32.mrb[0].mxu0
    %391 = vmatprep.mubr.f32.mxu0 0.0
    %392 = vmatmul.mubr.f32.gmra.mrb[0].mxu0 %v141
    %v393 = vpop.f32.mrb[0].mxu0
    %v394 = vadd.f32 %v83, %v393
    %v395 = vpop.f32.mrb[0].mxu0
    %396 = vmatprep.mubr.f32.mxu0 0.0
    %397 = vmatmul.mubr.f32.gmra.mrb[0].mxu0 %v144
    %v398 = vpop.f32.mrb[0].mxu0
    %v399 = vadd.f32 %v83, %v398
    %v400 = vpop.f32.mrb[0].mxu0
    %401 = vmatprep.mubr.f32.mxu0 0.0
    %402 = vmatmul.mubr.f32.gmra.mrb[0].mxu0 %v147
    %v403 = vpop.f32.mrb[0].mxu0
    %v404 = vadd.f32 %v83, %v403
    %v405 = vpop.f32.mrb[0].mxu0
    %406 = vmatprep.mubr.f32.mxu0 0.0
    %407 = vmatmul.mubr.f32.gmra.mrb[0].mxu0 %v150
    %v408 = vpop.f32.mrb[0].mxu0
    %v409 = vadd.f32 %v83, %v408
    %v410 = vpop.f32.mrb[0].mxu0
    %411 = vmatprep.mubr.f32.mxu0 0.0
    %412 = vmatmul.mubr.f32.gmra.mrb[0].mxu0 %v153
    %v413 = vpop.f32.mrb[0].mxu0
    %v414 = vadd.f32 %v83, %v413
    %v415 = vpop.f32.mrb[0].mxu0
    %416 = vmatprep.mubr.f32.mxu0 0.0
    %417 = vmatmul.mubr.f32.gmra.mrb[0].mxu0 %v156
    %v418 = vpop.f32.mrb[0].mxu0
    %v419 = vadd.f32 %v83, %v418
    %v420 = vpop.f32.mrb[0].mxu0
    %421 = vmatprep.mubr.f32.mxu0 0.0
    %422 = vmatmul.mubr.f32.gmra.mrb[0].mxu0 %v159
    %v423 = vpop.f32.mrb[0].mxu0
    %v424 = vadd.f32 %v83, %v423
    %v425 = vpop.f32.mrb[0].mxu0
    %426 = vmatprep.mubr.f32.mxu0 0.0
    %427 = vmatmul.mubr.f32.gmra.mrb[0].mxu0 %v162
    %v428 = vpop.f32.mrb[0].mxu0
    %v429 = vadd.f32 %v83, %v428
    %v430 = vpop.f32.mrb[0].mxu0
    %431 = vmatprep.mubr.f32.mxu0 0.0
    %432 = vmatmul.mubr.f32.gmra.mrb[0].mxu0 %v165
    %v433 = vpop.f32.mrb[0].mxu0
    %v434 = vadd.f32 %v83, %v433
    %v435 = vpop.f32.mrb[0].mxu0
    %436 = vmatprep.mubr.f32.mxu0 0.0
    %437 = vmatmul.mubr.f32.gmra.mrb[0].mxu0 %v168
    %v438 = vpop.f32.mrb[0].mxu0
    %v439 = vadd.f32 %v83, %v438
    %v440 = vpop.f32.mrb[0].mxu0
    %441 = vmatprep.mubr.f32.mxu0 0.0
    %442 = vmatmul.mubr.f32.gmra.mrb[0].mxu0 %v171
    %v443 = vpop.f32.mrb[0].mxu0
    %v444 = vadd.f32 %v83, %v443
    %v445 = vpop.f32.mrb[0].mxu0
    %446 = vmatprep.mubr.f32.mxu0 0.0
    %447 = vmatmul.mubr.f32.gmra.mrb[0].mxu0 %v174
    %v448 = vpop.f32.mrb[0].mxu0
    %v449 = vadd.f32 %v83, %v448
    %v450 = vpop.f32.mrb[0].mxu0
    %451 = vmatprep.mubr.f32.mxu0 0.0
    %452 = vmatmul.mubr.f32.gmra.mrb[0].mxu0 %v177
    %v453 = vpop.f32.mrb[0].mxu0
    %v454 = vadd.f32 %v83, %v453
    %v455 = vpop.f32.mrb[0].mxu0
    %456 = vmatprep.mubr.f32.mxu0 0.0
    %457 = vmatmul.mubr.f32.gmra.mrb[0].mxu0 %v180
    %v458 = vpop.f32.mrb[0].mxu0
    %v459 = vadd.f32 %v83, %v458
    %v460 = vpop.f32.mrb[0].mxu0
    %461 = vmatprep.mubr.f32.mxu0 0.0
    %462 = vmatmul.mubr.f32.gmra.mrb[0].mxu0 %v183
    %v463 = vpop.f32.mrb[0].mxu0
    %v464 = vadd.f32 %v83, %v463
    %v465 = vpop.f32.mrb[0].mxu0
    %466 = vmatprep.mubr.f32.mxu0 0.0
    %467 = vmatmul.mubr.f32.gmra.mrb[0].mxu0 %v186
    %v468 = vpop.f32.mrb[0].mxu0
    %v469 = vadd.f32 %v83, %v468
    %v470 = vpop.f32.mrb[0].mxu0
    %471 = vmatprep.mubr.f32.mxu0 0.0
    %472 = vmatmul.mubr.f32.gmra.mrb[0].mxu0 %v189
    %v473 = vpop.f32.mrb[0].mxu0
    %v474 = vadd.f32 %v83, %v473
    %v475 = vpop.f32.mrb[0].mxu0
    %476 = vmatprep.mubr.f32.mxu0 0.0
    %477 = vmatmul.mubr.f32.gmra.mrb[0].mxu0 %v192
    %v478 = vpop.f32.mrb[0].mxu0
    %v479 = vadd.f32 %v83, %v478
    %v480 = vpop.f32.mrb[0].mxu0
    %481 = vmatprep.mubr.f32.mxu0 0.0
    %482 = vmatmul.mubr.f32.gmra.mrb[0].mxu0 %v195
    %v483 = vpop.f32.mrb[0].mxu0
    %v484 = vadd.f32 %v83, %v483
    %v485 = vpop.f32.mrb[0].mxu0
    %486 = vmatprep.mubr.f32.mxu0 0.0
    %487 = vmatmul.mubr.f32.gmra.mrb[0].mxu0 %v198
    %v488 = vpop.f32.mrb[0].mxu0
    %v489 = vadd.f32 %v83, %v488
    %v490 = vpop.f32.mrb[0].mxu0
    %491 = vmatprep.mubr.f32.mxu0 0.0
    %492 = vmatmul.mubr.f32.gmra.mrb[0].mxu0 %v201
    %v493 = vpop.f32.mrb[0].mxu0
    %v494 = vadd.f32 %v83, %v493
    %v495 = vpop.f32.mrb[0].mxu0
    %496 = vmatprep.mubr.f32.mxu0 0.0
    %497 = vmatmul.mubr.f32.gmra.mrb[0].mxu0 %v204
    %v498 = vpop.f32.mrb[0].mxu0
    %v499 = vadd.f32 %v83, %v498
    %v500 = vpop.f32.mrb[0].mxu0
    %501 = vmatprep.mubr.f32.mxu0 0.0
    %502 = vmatmul.mubr.f32.gmra.mrb[0].mxu0 %v207
    %v503 = vpop.f32.mrb[0].mxu0
    %v504 = vadd.f32 %v83, %v503
    %v505 = vpop.f32.mrb[0].mxu0
    %506 = vmatprep.mubr.f32.mxu0 0.0
    %507 = vmatmul.mubr.f32.gmra.mrb[0].mxu0 %v210
    %v508 = vpop.f32.mrb[0].mxu0
    %v509 = vadd.f32 %v83, %v508
    %v510 = vpop.f32.mrb[0].mxu0
    %511 = vmatprep.mubr.f32.mxu0 0.0
    %512 = vmatmul.mubr.f32.gmra.mrb[0].mxu0 %v213
    %v513 = vpop.f32.mrb[0].mxu0
    %v514 = vadd.f32 %v83, %v513
    %v515 = vpop.f32.mrb[0].mxu0
    %516 = vmatprep.mubr.f32.mxu0 0.0
    %517 = vmatmul.mubr.f32.gmra.mrb[0].mxu0 %v216
    %v518 = vpop.f32.mrb[0].mxu0
    %v519 = vadd.f32 %v83, %v518
    %v520 = vpop.f32.mrb[0].mxu0
    %521 = vmatprep.mubr.f32.mxu0 0.0
    %522 = vmatmul.mubr.f32.gmra.mrb[0].mxu0 %v219
    %v523 = vpop.f32.mrb[0].mxu0
    %v524 = vadd.f32 %v83, %v523
    %v525 = vpop.f32.mrb[0].mxu0
    %526 = vmatprep.mubr.f32.mxu0 0.0
    %527 = vmatmul.mubr.f32.gmra.mrb[0].mxu0 %v222
    %v528 = vpop.f32.mrb[0].mxu0
    %v529 = vadd.f32 %v83, %v528
    %v530 = vpop.f32.mrb[0].mxu0
    %531 = vmatprep.mubr.f32.mxu0 0.0
    %532 = vmatmul.mubr.f32.gmra.mrb[0].mxu0 %v225
    %v533 = vpop.f32.mrb[0].mxu0
    %v534 = vadd.f32 %v83, %v533
    %v535 = vpop.f32.mrb[0].mxu0
    %536 = vmatprep.mubr.f32.mxu0 0.0
    %537 = vmatmul.mubr.f32.gmra.mrb[0].mxu0 %v228
    %v538 = vpop.f32.mrb[0].mxu0
    %v539 = vadd.f32 %v83, %v538
    %v540 = vpop.f32.mrb[0].mxu0
    %541 = vmatprep.mubr.f32.mxu0 0.0
    %542 = vmatmul.mubr.f32.gmra.mrb[0].mxu0 %v231
    %v543 = vpop.f32.mrb[0].mxu0
    %v544 = vadd.f32 %v83, %v543
    %v545 = vpop.f32.mrb[0].mxu0
    %546 = vdwg.mxu0
    %v547 = vmax.f32 %v304, 0.0
    %v548 = vmax.f32 %v309, 0.0
    %v549 = vmax.f32 %v314, 0.0
    %v550 = vmax.f32 %v319, 0.0
    %v551 = vmax.f32 %v324, 0.0
    %v552 = vmax.f32 %v329, 0.0
    %v553 = vmax.f32 %v334, 0.0
    %v554 = vmax.f32 %v339, 0.0
    %v555 = vmax.f32 %v344, 0.0
    %v556 = vmax.f32 %v349, 0.0
    %v557 = vmax.f32 %v354, 0.0
    %v558 = vmax.f32 %v359, 0.0
    %v559 = vmax.f32 %v364, 0.0
    %v560 = vmax.f32 %v369, 0.0
    %v561 = vmax.f32 %v374, 0.0
    %v562 = vmax.f32 %v379, 0.0
    %v563 = vmax.f32 %v384, 0.0
    %v564 = vmax.f32 %v389, 0.0
    %v565 = vmax.f32 %v394, 0.0
    %v566 = vmax.f32 %v399, 0.0
    %v567 = vmax.f32 %v404, 0.0
    %v568 = vmax.f32 %v409, 0.0
    %v569 = vmax.f32 %v414, 0.0
    %v570 = vmax.f32 %v419, 0.0
    %v571 = vmax.f32 %v424, 0.0
    %v572 = vmax.f32 %v429, 0.0
    %v573 = vmax.f32 %v434, 0.0
    %v574 = vmax.f32 %v439, 0.0
    %v575 = vmax.f32 %v444, 0.0
    %v576 = vmax.f32 %v449, 0.0
    %v577 = vmax.f32 %v454, 0.0
    %v578 = vmax.f32 %v459, 0.0
    %v579 = vmax.f32 %v464, 0.0
    %v580 = vmax.f32 %v469, 0.0
    %v581 = vmax.f32 %v474, 0.0
    %v582 = vmax.f32 %v479, 0.0
    %v583 = vmax.f32 %v484, 0.0
    %v584 = vmax.f32 %v489, 0.0
    %v585 = vmax.f32 %v494, 0.0
    %v586 = vmax.f32 %v499, 0.0
    %v587 = vmax.f32 %v504, 0.0
    %v588 = vmax.f32 %v509, 0.0
    %v589 = vmax.f32 %v514, 0.0
    %v590 = vmax.f32 %v519, 0.0
    %v591 = vmax.f32 %v524, 0.0
    %v592 = vmax.f32 %v529, 0.0
    %v593 = vmax.f32 %v534, 0.0
    %v594 = vmax.f32 %v539, 0.0
    %v595 = vmax.f32 %v544, 0.0
    %v596 = vld [vmem:[%s3] sm:$0xff]
    %v598 = vcombine.high %v596, %v596
    %v600 = vunpack.c.l.s4 1983009808
    %v601 = vunpack.c.0.s8 %v600
    %v602 = vlaneseq
    %v603 = vshrl.u32 %v602, 7
    %v604 = vsub.s32 %v601, %v603
    %v605 = vrot.slane %v596, %v604
    %v607 = vunpack.c.l.s4 1983009808
    %v608 = vunpack.c.0.s8 %v607
    %v609 = vlaneseq
    %v610 = vshrl.u32 %v609, 7
    %v611 = vsub.s32 %v608, %v610
    %v612 = vrot.slane %v598, %v611
    %v613 = vcombine.high %v605, %v605
    %v614 = vcombine.high %v612, %v612
    %vm618 = vcmask 64512
    %v619 = vsel %vm618, %v614, 0
    %621 = vmatprep.subr.mxu0 0.0
    %622 = vmatpush1.msra.mxu0 %v547
    %623 = vmatprep.subr.mxu0 0.0
    %624 = vmatpush1.msra.mxu0 %v548
    %625 = vmatprep.subr.mxu0 0.0
    %626 = vmatpush1.msra.mxu0 %v549
    %627 = vmatprep.subr.mxu0 0.0
    %628 = vmatpush1.msra.mxu0 %v550
    %629 = vmatprep.subr.mxu0 0.0
    %630 = vmatpush1.msra.mxu0 %v551
    %631 = vmatprep.subr.mxu0 0.0
    %632 = vmatpush1.msra.mxu0 %v552
    %633 = vmatprep.subr.mxu0 0.0
    %634 = vmatpush1.msra.mxu0 %v553
    %635 = vmatprep.subr.mxu0 0.0
    %636 = vmatpush1.msra.mxu0 %v554
    %637 = vmatprep.subr.mxu0 0.0
    %638 = vmatpush1.msra.mxu0 %v555
    %639 = vmatprep.subr.mxu0 0.0
    %640 = vmatpush1.msra.mxu0 %v556
    %641 = vmatprep.subr.mxu0 0.0
    %642 = vmatpush1.msra.mxu0 %v557
    %643 = vmatprep.subr.mxu0 0.0
    %644 = vmatpush1.msra.mxu0 %v558
    %645 = vmatprep.subr.mxu0 0.0
    %646 = vmatpush1.msra.mxu0 %v559
    %647 = vmatprep.subr.mxu0 0.0
    %648 = vmatpush1.msra.mxu0 %v560
    %649 = vmatprep.subr.mxu0 0.0
    %650 = vmatpush1.msra.mxu0 %v561
    %651 = vmatprep.subr.mxu0 0.0
    %652 = vmatpush1.msra.mxu0 %v562
    %653 = vmatprep.subr.mxu0 0.0
    %654 = vmatpush1.msra.mxu0 %v563
    %655 = vmatprep.subr.mxu0 0.0
    %656 = vmatpush1.msra.mxu0 %v564
    %657 = vmatprep.subr.mxu0 0.0
    %658 = vmatpush1.msra.mxu0 %v565
    %659 = vmatprep.subr.mxu0 0.0
    %660 = vmatpush1.msra.mxu0 %v566
    %661 = vmatprep.subr.mxu0 0.0
    %662 = vmatpush1.msra.mxu0 %v567
    %663 = vmatprep.subr.mxu0 0.0
    %664 = vmatpush1.msra.mxu0 %v568
    %665 = vmatprep.subr.mxu0 0.0
    %666 = vmatpush1.msra.mxu0 %v569
    %667 = vmatprep.subr.mxu0 0.0
    %668 = vmatpush1.msra.mxu0 %v570
    %669 = vmatprep.subr.mxu0 0.0
    %670 = vmatpush1.msra.mxu0 %v571
    %671 = vmatprep.subr.mxu0 0.0
    %672 = vmatpush1.msra.mxu0 %v572
    %673 = vmatprep.subr.mxu0 0.0
    %674 = vmatpush1.msra.mxu0 %v573
    %675 = vmatprep.subr.mxu0 0.0
    %676 = vmatpush1.msra.mxu0 %v574
    %677 = vmatprep.subr.mxu0 0.0
    %678 = vmatpush1.msra.mxu0 %v575
    %679 = vmatprep.subr.mxu0 0.0
    %680 = vmatpush1.msra.mxu0 %v576
    %681 = vmatprep.subr.mxu0 0.0
    %682 = vmatpush1.msra.mxu0 %v577
    %683 = vmatprep.subr.mxu0 0.0
    %684 = vmatpush1.msra.mxu0 %v578
    %685 = vmatprep.mubr.f32.mxu0 %v613
    %686 = vmatmul.mubr.f32.gmra.mrb[0].mxu0 %v605
    %v687 = vpop.f32.mrb[0].mxu0
    %v688 = vadd.f32 0.0, %v687
    %v689 = vpop.f32.mrb[0].mxu0
    %690 = vdwg.mxu0
    %691 = vmatprep.subr.mxu0 0.0
    %692 = vmatpush1.msra.mxu0 %v579
    %693 = vmatprep.subr.mxu0 0.0
    %694 = vmatpush1.msra.mxu0 %v580
    %695 = vmatprep.subr.mxu0 0.0
    %696 = vmatpush1.msra.mxu0 %v581
    %697 = vmatprep.subr.mxu0 0.0
    %698 = vmatpush1.msra.mxu0 %v582
    %699 = vmatprep.subr.mxu0 0.0
    %700 = vmatpush1.msra.mxu0 %v583
    %701 = vmatprep.subr.mxu0 0.0
    %702 = vmatpush1.msra.mxu0 %v584
    %703 = vmatprep.subr.mxu0 0.0
    %704 = vmatpush1.msra.mxu0 %v585
    %705 = vmatprep.subr.mxu0 0.0
    %706 = vmatpush1.msra.mxu0 %v586
    %707 = vmatprep.subr.mxu0 0.0
    %708 = vmatpush1.msra.mxu0 %v587
    %709 = vmatprep.subr.mxu0 0.0
    %710 = vmatpush1.msra.mxu0 %v588
    %711 = vmatprep.subr.mxu0 0.0
    %712 = vmatpush1.msra.mxu0 %v589
    %713 = vmatprep.subr.mxu0 0.0
    %714 = vmatpush1.msra.mxu0 %v590
    %715 = vmatprep.subr.mxu0 0.0
    %716 = vmatpush1.msra.mxu0 %v591
    %717 = vmatprep.subr.mxu0 0.0
    %718 = vmatpush1.msra.mxu0 %v592
    %719 = vmatprep.subr.mxu0 0.0
    %720 = vmatpush1.msra.mxu0 %v593
    %721 = vmatprep.subr.mxu0 0.0
    %722 = vmatpush1.msra.mxu0 %v594
    %723 = vmatprep.subr.mxu0 0.0
    %724 = vmatpush1.msra.mxu0 %v595
    %725 = vmatprep.subr.mxu0 0.0
    %726 = vmatpush1.msra.mxu0 0.0
    %727 = vmatprep.subr.mxu0 0.0
    %728 = vmatpush1.msra.mxu0 0.0
    %729 = vmatprep.subr.mxu0 0.0
    %730 = vmatpush1.msra.mxu0 0.0
    %731 = vmatprep.subr.mxu0 0.0
    %732 = vmatpush1.msra.mxu0 0.0
    %733 = vmatprep.subr.mxu0 0.0
    %734 = vmatpush1.msra.mxu0 0.0
    %735 = vmatprep.subr.mxu0 0.0
    %736 = vmatpush1.msra.mxu0 0.0
    %737 = vmatprep.subr.mxu0 0.0
    %738 = vmatpush1.msra.mxu0 0.0
    %739 = vmatprep.subr.mxu0 0.0
    %740 = vmatpush1.msra.mxu0 0.0
    %741 = vmatprep.subr.mxu0 0.0
    %742 = vmatpush1.msra.mxu0 0.0
    %743 = vmatprep.subr.mxu0 0.0
    %744 = vmatpush1.msra.mxu0 0.0
    %745 = vmatprep.subr.mxu0 0.0
    %746 = vmatpush1.msra.mxu0 0.0
    %747 = vmatprep.subr.mxu0 0.0
    %748 = vmatpush1.msra.mxu0 0.0
    %749 = vmatprep.subr.mxu0 0.0
    %750 = vmatpush1.msra.mxu0 0.0
    %751 = vmatprep.subr.mxu0 0.0
    %752 = vmatpush1.msra.mxu0 0.0
    %753 = vmatprep.subr.mxu0 0.0
    %754 = vmatpush1.msra.mxu0 0.0
    %755 = vmatprep.mubr.f32.mxu0 %v619
    %756 = vmatmul.mubr.f32.gmra.mrb[0].mxu0 %v612
    %v757 = vpop.f32.mrb[0].mxu0
    %v758 = vadd.f32 %v688, %v757
    %v759 = vpop.f32.mrb[0].mxu0
    %760 = vdwg.mxu0
    %v761 = vld [vmem:[%s4] sm:$0xff]
    %v762 = vld [vmem:[%s4 + $0x8] sm:$0xff]
    %v763 = vld [vmem:[%s4 + $0x10] sm:$0xff]
    %v764 = vld [vmem:[%s4 + $0x18] sm:$0xff]
    %v765 = vld [vmem:[%s4 + $0x20] sm:$0xff]
    %v766 = vld [vmem:[%s4 + $0x28] sm:$0xff]
    %v767 = vld [vmem:[%s4 + $0x30] sm:$0xff]
    %v768 = vld [vmem:[%s4 + $0x38] sm:$0xff]
    %v769 = vld [vmem:[%s4 + $0x40] sm:$0xff]
    %v770 = vld [vmem:[%s4 + $0x48] sm:$0xff]
    %v771 = vld [vmem:[%s4 + $0x50] sm:$0xff]
    %v772 = vld [vmem:[%s4 + $0x58] sm:$0xff]
    %v773 = vld [vmem:[%s4 + $0x60] sm:$0xff]
    %v774 = vld [vmem:[%s4 + $0x68] sm:$0xff]
    %v775 = vld [vmem:[%s4 + $0x70] sm:$0xff]
    %v776 = vld [vmem:[%s4 + $0x78] sm:$0xff]
    %v777 = vld [vmem:[%s5] sm:$0x1]
    %v779 = vlaneseq
    %v780 = vshrl.u32 %v779, 7
    %v781 = vsub.s32 0, %v780
    %v782 = vrot.slane %v777, %v781
    %784 = vmatprep.subr.mxu0 0.0
    %785 = vmatpush1.msra.mxu0 %v761
    %786 = vmatprep.subr.mxu0 0.0
    %787 = vmatpush1.msra.mxu0 %v762
    %788 = vmatprep.subr.mxu0 0.0
    %789 = vmatpush1.msra.mxu0 %v763
    %790 = vmatprep.subr.mxu0 0.0
    %791 = vmatpush1.msra.mxu0 %v764
    %792 = vmatprep.subr.mxu0 0.0
    %793 = vmatpush1.msra.mxu0 %v765
    %794 = vmatprep.subr.mxu0 0.0
    %795 = vmatpush1.msra.mxu0 %v766
    %796 = vmatprep.subr.mxu0 0.0
    %797 = vmatpush1.msra.mxu0 %v767
    %798 = vmatprep.subr.mxu0 0.0
    %799 = vmatpush1.msra.mxu0 %v768
    %800 = vmatprep.subr.mxu0 0.0
    %801 = vmatpush1.msra.mxu0 %v769
    %802 = vmatprep.subr.mxu0 0.0
    %803 = vmatpush1.msra.mxu0 %v770
    %804 = vmatprep.subr.mxu0 0.0
    %805 = vmatpush1.msra.mxu0 %v771
    %806 = vmatprep.subr.mxu0 0.0
    %807 = vmatpush1.msra.mxu0 %v772
    %808 = vmatprep.subr.mxu0 0.0
    %809 = vmatpush1.msra.mxu0 %v773
    %810 = vmatprep.subr.mxu0 0.0
    %811 = vmatpush1.msra.mxu0 %v774
    %812 = vmatprep.subr.mxu0 0.0
    %813 = vmatpush1.msra.mxu0 %v775
    %814 = vmatprep.subr.mxu0 0.0
    %815 = vmatpush1.msra.mxu0 %v776
    %816 = vmatprep.subr.mxu0 0.0
    %817 = vmatpush1.msra.mxu0 0.0
    %818 = vmatprep.subr.mxu0 0.0
    %819 = vmatpush1.msra.mxu0 0.0
    %820 = vmatprep.subr.mxu0 0.0
    %821 = vmatpush1.msra.mxu0 0.0
    %822 = vmatprep.subr.mxu0 0.0
    %823 = vmatpush1.msra.mxu0 0.0
    %824 = vmatprep.subr.mxu0 0.0
    %825 = vmatpush1.msra.mxu0 0.0
    %826 = vmatprep.subr.mxu0 0.0
    %827 = vmatpush1.msra.mxu0 0.0
    %828 = vmatprep.subr.mxu0 0.0
    %829 = vmatpush1.msra.mxu0 0.0
    %830 = vmatprep.subr.mxu0 0.0
    %831 = vmatpush1.msra.mxu0 0.0
    %832 = vmatprep.subr.mxu0 0.0
    %833 = vmatpush1.msra.mxu0 0.0
    %834 = vmatprep.subr.mxu0 0.0
    %835 = vmatpush1.msra.mxu0 0.0
    %836 = vmatprep.subr.mxu0 0.0
    %837 = vmatpush1.msra.mxu0 0.0
    %838 = vmatprep.subr.mxu0 0.0
    %839 = vmatpush1.msra.mxu0 0.0
    %840 = vmatprep.subr.mxu0 0.0
    %841 = vmatpush1.msra.mxu0 0.0
    %842 = vmatprep.subr.mxu0 0.0
    %843 = vmatpush1.msra.mxu0 0.0
    %844 = vmatprep.subr.mxu0 0.0
    %845 = vmatpush1.msra.mxu0 0.0
    %846 = vmatprep.subr.mxu0 0.0
    %847 = vmatpush1.msra.mxu0 0.0
    %848 = vmatprep.mubr.f32.mxu0 0.0
    %849 = vmatmul.mubr.f32.gmra.mrb[0].mxu0 %v758
    %v850 = vpop.f32.mrb[0].mxu0
    %v851 = vadd.f32 %v782, %v850
    %v852 = vpop.f32.mrb[0].mxu0
    %853 = vdwg.mxu0
    %854 = vst [vmem:[#allocation2] sm:$0x3] %v851
    // Predicated region
    $region26: #{tpu_custom_call.1} parent=1 // pred_check
      _
    $region27: #{tpu_custom_call.1} parent=1 // pred_check_branch
      %856 = sbr.rel (0) target = $region29
    $region28: #{tpu_custom_call.1} parent=1 // pred_region
      %s858 = ssub.s32 32, 32
      %859 = vsyncadd [#allocation3], %s858
      %s861 = sshll.u32 [#allocation2], 4
      %s862 = int_to_ptr.vmem [resolvable:$true] %s861
      %864 = dma.vmem_to_hbm [thread:$0]  %s862, 32, %s6, [#allocation3]
    $region29: #{tpu_custom_call.1} parent=1 // pred_fallthru
      _
    // Predicated region
    $region30: #{tpu_custom_call.1} parent=1 // pred_check
      _
    $region31: #{tpu_custom_call.1} parent=1 // pred_check_branch
      %866 = sbr.rel (0) target = $region33
    $region32: #{tpu_custom_call.1} parent=1 // pred_region
      %867 = dma.done [#allocation3], 32
    $region33: #{tpu_custom_call.1} parent=1 // pred_fallthru
      _
    %868 = vsyncpa [#allocation3], 1

</llo_original>
